<compile_context>
chip_gen: v5e
topology: v5e:2x2
jax: 0.10.0
libtpu: 0.0.40
codegen_flags: <defaults>
</compile_context>

<pallas_src>
import math

import jax
import jax.numpy as jnp
from jax import lax
from jax.experimental import pallas as pl
from jax.experimental.pallas import tpu as pltpu


def _round_up(v, m):
    return ((v + m - 1) // m) * m


def _cdiv(a, b):
    return -(-a // b)


def _pick_batch_tiling(B):
    """Choose (BT, num_tiles). Rows per grid step = BT*L.

    * tiny B: one tile -> every block equals the full array (always legal).
    * larger B: BT rounded to a multiple of 8 (sublane-aligned ctt/out blocks) and an
      even tile count so v7x's two TensorCores get balanced work under
      dimension_semantics=('parallel',).
    """
    BT_CAP = 64
    if B < 16:
        return B, 1
    num_tiles = max(2, 2 * _cdiv(B, 2 * BT_CAP))
    BT = _round_up(_cdiv(B, num_tiles), 8)
    num_tiles = _cdiv(B, BT)
    num_tiles += num_tiles % 2
    return BT, num_tiles


def _encoder_kernel(x_ref, wc_ref, woutT_ref, bout_ref, ctt_ref, o_ref):
    """One grid step == one batch tile (BT batch elements, each owning L matmul rows).

    x_ref    : (BT*L, KC)  im2col slab; per batch element row 0 is a dummy row,
                           rows 1..L-1 are conv windows; column KW is the 1.0 bias
                           ride-along column.
    wc_ref   : (KC, D)     block-diagonal conv weight (conv1 -> cols [:H],
                           conv2 -> cols [H:]); row KW holds concat(b1, b2).
    woutT_ref: (D, D)      combine Linear weight, transposed to (in, out).
    bout_ref : (1, D)      combine Linear bias.
    ctt_ref  : (BT, D)     cell-type token embeddings for this tile.
    o_ref    : (BT, L, D)  output: row 0 = ctt, rows 1..L-1 = conv+linear.
    """
    BT, L, D = o_ref.shape

    # Fused conv1+conv2 (im2col, block-diagonal weight, bias folded in) + ReLU:
    # one MXU push, f32 accumulation.
    r = jnp.maximum(
        jnp.dot(x_ref[...], wc_ref[...], preferred_element_type=jnp.float32), 0.0)

    # Fused combine Linear: one MXU push (bf16 x bf16 when input_dtype is bf16).
    y = (jnp.dot(r.astype(woutT_ref.dtype), woutT_ref[...],
                 preferred_element_type=jnp.float32)
         + bout_ref[...])

    # Aligned full-block store (free reshape when L is a multiple of 8), then one
    # vectorized strided store for the cell-type-token row.
    o_ref[...] = y.reshape(BT, L, D).astype(o_ref.dtype)
    o_ref[:, 0, :] = ctt_ref[...].astype(o_ref.dtype)


def joint_cnn_with_ctt(x1, x2, token, params, *, input_dtype=jnp.float32):
    """x1: (B, d_input1, L), x2: (B, d_input2, L), token: (B,) int32.

    Returns (B, d_model, L) float32, matching the PyTorch module.
    `input_dtype=jnp.bfloat16` enables the narrow-input MXU/DMA path (v6e/v7x).
    """
    B, C1, L = x1.shape
    _, C2, _ = x2.shape
    w1 = params["w1"]            # (H, C1, K)  torch Conv1d layout (out, in, k)
    w2 = params["w2"]            # (H, C2, K)
    b1 = params["b1"]            # (H,)
    b2 = params["b2"]            # (H,)
    w_out = params["w_out"]      # (D, D)      torch Linear layout (out, in)
    b_out = params["b_out"]      # (D,)
    emb = params["emb"]          # (celltypes, D)

    H, _, K = w1.shape
    D = w_out.shape[0]
    pad = (K - 1) // 2           # 'same' padding (odd K, matches torch for K=15)
    Lout = L - 1

    CG = C1 + C2                 # interleaved channel group per tap (6 + 2 = 8)
    KW = K * CG                  # 120 for the default config
    KC = _round_up(KW + 1, 128)  # +1 for the bias ride-along column -> 128

    BT, num_tiles = _pick_batch_tiling(B)
    Bpad = BT * num_tiles

    # ---- im2col (XLA glue): channel-interleaved taps, one row per output position,
    # ---- one leading dummy row per batch element (row 0 -> overwritten by ctt).
    xw = jnp.concatenate([x1, x2], axis=1)[:, :, 1:]                    # (B, CG, Lout)
    xw = jnp.transpose(xw, (0, 2, 1)).astype(jnp.float32)               # (B, Lout, CG)
    xw = jnp.pad(xw, ((0, Bpad - B), (pad, pad), (0, 0)))               # (Bpad, Lp, CG)
    taps = jnp.stack([xw[:, k:k + Lout, :] for k in range(K)], axis=2)  # (Bpad, Lout, K, CG)
    conv_cols = taps.reshape(Bpad, Lout, KW)
    conv_cols = jnp.pad(conv_cols, ((0, 0), (1, 0), (0, 0)))            # (Bpad, L, KW)
    ones_col = jnp.ones((Bpad, L, 1), jnp.float32)                      # bias ride-along
    zpad = jnp.zeros((Bpad, L, KC - KW - 1), jnp.float32)
    cols = jnp.concatenate([conv_cols, ones_col, zpad], axis=-1)        # (Bpad, L, KC)
    cols = cols.reshape(Bpad * L, KC).astype(input_dtype)

    # ---- block-diagonal conv weight, tap-major / channel-interleaved to match cols.
    w1t = jnp.transpose(w1, (2, 1, 0)).astype(jnp.float32)              # (K, C1, H)
    w2t = jnp.transpose(w2, (2, 1, 0)).astype(jnp.float32)              # (K, C2, H)
    top = jnp.concatenate([w1t, jnp.zeros((K, C1, D - H), jnp.float32)], axis=-1)
    bot = jnp.concatenate([jnp.zeros((K, C2, H), jnp.float32), w2t], axis=-1)
    wc = jnp.concatenate([top, bot], axis=1).reshape(KW, D)             # (KW, D)
    bc = jnp.concatenate([b1, b2]).reshape(1, D).astype(jnp.float32)    # bias row at KW
    wc = jnp.concatenate(
        [wc, bc, jnp.zeros((KC - KW - 1, D), jnp.float32)], axis=0)     # (KC, D)
    wc = wc.astype(input_dtype)

    woutT = jnp.transpose(w_out).astype(input_dtype)                    # (in, out)
    boutr = b_out.reshape(1, D).astype(jnp.float32)

    ctt = jnp.take(emb, token, axis=0).astype(jnp.float32)              # (B, D) glue
    ctt = jnp.pad(ctt, ((0, Bpad - B), (0, 0)))                         # (Bpad, D)

    out = pl.pallas_call(
        _encoder_kernel,
        out_shape=jax.ShapeDtypeStruct((Bpad, L, D), jnp.float32),
        grid_spec=pltpu.PrefetchScalarGridSpec(
            num_scalar_prefetch=0,
            grid=(num_tiles,),
            in_specs=[
                pl.BlockSpec((BT * L, KC), lambda i: (i, 0)),   # streaming x slab
                pl.BlockSpec((KC, D), lambda i: (0, 0)),        # VMEM-resident weights
                pl.BlockSpec((D, D), lambda i: (0, 0)),
                pl.BlockSpec((1, D), lambda i: (0, 0)),
                pl.BlockSpec((BT, D), lambda i: (i, 0)),        # BT==Bpad or BT%8==0
            ],
            out_specs=pl.BlockSpec((BT, L, D), lambda i: (i, 0, 0)),
        ),
        compiler_params=pltpu.CompilerParams(
            dimension_semantics=("parallel",)),
    )(cols, wc, woutT, boutr, ctt)

    out = out[:B]                                   # drop batch padding
    return jnp.transpose(out, (0, 2, 1))            # (B, D, L) to match torch NCW


def reference_forward(x1, x2, token, params):
    """Pure-JAX reference mirroring the PyTorch forward."""
    w1, b1 = params["w1"], params["b1"]
    w2, b2 = params["w2"], params["b2"]
    w_out, b_out = params["w_out"], params["b_out"]
    emb = params["emb"]
    K = w1.shape[-1]
    pad = (K - 1) // 2

    x1c = x1[:, :, 1:]
    x2c = x2[:, :, 1:]

    def conv1d(x, w, b):
        y = lax.conv_general_dilated(
            x, w, window_strides=(1,), padding=[(pad, pad)],
            dimension_numbers=("NCH", "OIH", "NCH"))
        return jax.nn.relu(y + b[None, :, None])

    y1 = conv1d(x1c, w1, b1)
    y2 = conv1d(x2c, w2, b2)
    y = jnp.concatenate([y1, y2], axis=1)                    # (B, D, L-1)
    yt = jnp.transpose(y, (0, 2, 1))                          # (B, L-1, D)
    yt = yt @ w_out.T + b_out
    y = jnp.transpose(yt, (0, 2, 1))                          # (B, D, L-1)
    ctt = jnp.take(emb, token, axis=0)[:, :, None]            # (B, D, 1)
    return jnp.concatenate([ctt, y], axis=2)                  # (B, D, L)


def make_params(key, d_model=32, celltypes=5, d_input1=6, d_input2=2, kernel_size=15):
    H = d_model // 2
    ks = jax.random.split(key, 7)

    def u(k, shape, fan_in):
        bound = 1.0 / math.sqrt(fan_in)
        return jax.random.uniform(k, shape, jnp.float32, -bound, bound)

    return {
        "w1": u(ks[0], (H, d_input1, kernel_size), d_input1 * kernel_size),
        "b1": u(ks[1], (H,), d_input1 * kernel_size),
        "w2": u(ks[2], (H, d_input2, kernel_size), d_input2 * kernel_size),
        "b2": u(ks[3], (H,), d_input2 * kernel_size),
        "w_out": u(ks[4], (d_model, d_model), d_model),
        "b_out": u(ks[5], (d_model,), d_model),
        "emb": jax.random.normal(ks[6], (celltypes, d_model), jnp.float32),
    }


if __name__ == "__main__":
    B, d_input1, d_input2, L = 2, 6, 2, 16
    d_model, celltypes, kernel_size = 32, 5, 15

    key = jax.random.PRNGKey(0)
    k_x1, k_x2, k_tok, k_par = jax.random.split(key, 4)

    x1 = jax.random.normal(k_x1, (B, d_input1, L), jnp.float32)
    x2 = jax.random.normal(k_x2, (B, d_input2, L), jnp.float32)
    token = jax.random.randint(k_tok, (B,), 0, celltypes, jnp.int32)
    params = make_params(k_par, d_model, celltypes, d_input1, d_input2, kernel_size)

    ref = jax.block_until_ready(reference_forward(x1, x2, token, params))

    # f32 inputs (default): bit-for-bit-comparable to the previous version's accuracy.
    out = jax.block_until_ready(joint_cnn_with_ctt(x1, x2, token, params))
    assert out.shape == (B, d_model, L), out.shape
    assert jnp.allclose(out, ref, atol=1e-4, rtol=1e-4), float(jnp.max(jnp.abs(out - ref)))

    # bf16-input path (v6e/v7x): halved x-slab DMA + single-pass bf16 MXU; looser tolerance.
    out_bf16 = jax.block_until_ready(
        joint_cnn_with_ctt(x1, x2, token, params, input_dtype=jnp.bfloat16))
    assert jnp.allclose(out_bf16, ref, atol=3e-2, rtol=3e-2), \
        float(jnp.max(jnp.abs(out_bf16 - ref)))

    print("KERNEL_OK")
</pallas_src>

<mosaic_0001>
module attributes {stable_mosaic.version = 11 : i64} {
  func.func @_encoder_kernel(%arg0: i32, %arg1: memref<32x128xf32, #tpu.memory_space<vmem>>, %arg2: memref<128x32xf32, #tpu.memory_space<vmem>>, %arg3: memref<32x32xf32, #tpu.memory_space<vmem>>, %arg4: memref<1x32xf32, #tpu.memory_space<vmem>>, %arg5: memref<2x32xf32, #tpu.memory_space<vmem>>, %arg6: memref<2x16x32xf32, #tpu.memory_space<vmem>>) attributes {dimension_semantics = [#tpu.dimension_semantics<parallel>], iteration_bounds = array<i64: 1>, scalar_prefetch = 0 : i64, scratch_operands = 0 : i64, tpu.core_type = #tpu.core_type<tc>, window_params = [{transform_indices = @transform_0, window_bounds = array<i64: 32, 128>}, {pipeline_mode = #tpu.pipeline_mode<synchronous>, transform_indices = @transform_1, window_bounds = array<i64: 128, 32>}, {pipeline_mode = #tpu.pipeline_mode<synchronous>, transform_indices = @transform_2, window_bounds = array<i64: 32, 32>}, {pipeline_mode = #tpu.pipeline_mode<synchronous>, transform_indices = @transform_3, window_bounds = array<i64: 1, 32>}, {transform_indices = @transform_4, window_bounds = array<i64: 2, 32>}, {transform_indices = @transform_5, window_bounds = array<i64: 2, 16, 32>}]} {
    %c0 = arith.constant 0 : index
    %c0_0 = arith.constant 0 : index
    %0 = vector.load %arg1[%c0, %c0_0] : memref<32x128xf32, #tpu.memory_space<vmem>>, vector<32x128xf32>
    %c0_1 = arith.constant 0 : index
    %c0_2 = arith.constant 0 : index
    %1 = vector.load %arg2[%c0_1, %c0_2] : memref<128x32xf32, #tpu.memory_space<vmem>>, vector<128x32xf32>
    %cst = arith.constant dense<0.000000e+00> : vector<32x32xf32>
    %2 = tpu.matmul %0, %1, %cst {dimension_numbers = #tpu.dot_dimension_numbers<[1], [0], [0], [1], [0, 0, 1, 1], [], []>} : vector<32x128xf32>, vector<128x32xf32>, vector<32x32xf32> -> vector<32x32xf32>
    %cst_3 = arith.constant 0.000000e+00 : f32
    %3 = vector.broadcast %cst_3 : f32 to vector<32x32xf32>
    %4 = arith.maximumf %2, %3 : vector<32x32xf32>
    %c0_4 = arith.constant 0 : index
    %c0_5 = arith.constant 0 : index
    %5 = vector.load %arg3[%c0_4, %c0_5] : memref<32x32xf32, #tpu.memory_space<vmem>>, vector<32x32xf32>
    %cst_6 = arith.constant dense<0.000000e+00> : vector<32x32xf32>
    %6 = tpu.matmul %4, %5, %cst_6 {dimension_numbers = #tpu.dot_dimension_numbers<[1], [0], [0], [1], [0, 0, 1, 1], [], []>} : vector<32x32xf32>, vector<32x32xf32>, vector<32x32xf32> -> vector<32x32xf32>
    %c0_7 = arith.constant 0 : index
    %c0_8 = arith.constant 0 : index
    %7 = vector.load %arg4[%c0_7, %c0_8] : memref<1x32xf32, #tpu.memory_space<vmem>>, vector<1x32xf32>
    %8 = vector.broadcast %7 : vector<1x32xf32> to vector<32x32xf32>
    %9 = arith.addf %6, %8 : vector<32x32xf32>
    %10 = vector.shape_cast %9 : vector<32x32xf32> to vector<2x16x32xf32>
    %c0_9 = arith.constant 0 : index
    %c0_10 = arith.constant 0 : index
    %c0_11 = arith.constant 0 : index
    %11 = vector.load %arg6[%c0_9, %c0_10, %c0_11] : memref<2x16x32xf32, #tpu.memory_space<vmem>>, vector<2x16x32xf32>
    tpu.vector_store %arg6[%c0_9, %c0_10, %c0_11], %10 {strides = array<i32>} : memref<2x16x32xf32, #tpu.memory_space<vmem>>, vector<2x16x32xf32>,
    %c0_12 = arith.constant 0 : index
    %c0_13 = arith.constant 0 : index
    %12 = vector.load %arg5[%c0_12, %c0_13] : memref<2x32xf32, #tpu.memory_space<vmem>>, vector<2x32xf32>
    %c0_14 = arith.constant 0 : index
    %c0_15 = arith.constant 0 : index
    %c0_16 = arith.constant 0 : index
    %13 = vector.load %arg6[%c0_14, %c0_15, %c0_16] : memref<2x16x32xf32, #tpu.memory_space<vmem>>, vector<2x1x32xf32>
    %14 = vector.shape_cast %13 : vector<2x1x32xf32> to vector<2x32xf32>
    %15 = vector.shape_cast %12 : vector<2x32xf32> to vector<2x1x32xf32>
    tpu.vector_store %arg6[%c0_14, %c0_15, %c0_16], %15 {strides = array<i32>} : memref<2x16x32xf32, #tpu.memory_space<vmem>>, vector<2x1x32xf32>,
    return
  }
  func.func @transform_0(%arg0: i32) -> (i32, i32) {
    %c0_i32 = arith.constant 0 : i32
    %c0_i32_0 = arith.constant 0 : i32
    return %arg0, %c0_i32 : i32, i32
  }
  func.func @transform_1(%arg0: i32) -> (i32, i32) {
    %c0_i32 = arith.constant 0 : i32
    %c0_i32_0 = arith.constant 0 : i32
    %c0_i32_1 = arith.constant 0 : i32
    return %c0_i32, %c0_i32_0 : i32, i32
  }
  func.func @transform_2(%arg0: i32) -> (i32, i32) {
    %c0_i32 = arith.constant 0 : i32
    %c0_i32_0 = arith.constant 0 : i32
    %c0_i32_1 = arith.constant 0 : i32
    return %c0_i32, %c0_i32_0 : i32, i32
  }
  func.func @transform_3(%arg0: i32) -> (i32, i32) {
    %c0_i32 = arith.constant 0 : i32
    %c0_i32_0 = arith.constant 0 : i32
    %c0_i32_1 = arith.constant 0 : i32
    return %c0_i32, %c0_i32_0 : i32, i32
  }
  func.func @transform_4(%arg0: i32) -> (i32, i32) {
    %c0_i32 = arith.constant 0 : i32
    %c0_i32_0 = arith.constant 0 : i32
    return %arg0, %c0_i32 : i32, i32
  }
  func.func @transform_5(%arg0: i32) -> (i32, i32, i32) {
    %c0_i32 = arith.constant 0 : i32
    %c0_i32_0 = arith.constant 0 : i32
    %c0_i32_1 = arith.constant 0 : i32
    return %arg0, %c0_i32, %c0_i32_0 : i32, i32, i32
  }
}

</mosaic_0001>

<llo_original>
// kernel: tpu_custom_call.1
$region0: #{tpu_custom_call.1}
  #allocation0 [shape = 'u32[]', space=smem, size = 0x4, offset = 0x4, fixed_abs, tag = 'smem constant byte address 0x4 - core index']
  #allocation1 [shape = 'u32[72,128]{1,0:T(1,128)}', space=vmem, size = 0x9000, scoped, tag = 'internal scratch']
  %s0 = inlined_call_operand.vmem [shape: f32[32,128], index: 0, kind: input, shape index: {}]
  %s1 = inlined_call_operand.vmem [shape: f32[128,32], index: 1, kind: input, shape index: {}]
  %s2 = inlined_call_operand.vmem [shape: f32[32,32], index: 2, kind: input, shape index: {}]
  %s3 = inlined_call_operand.vmem [shape: f32[1,32], index: 3, kind: input, shape index: {}]
  %s4 = inlined_call_operand.vmem [shape: f32[2,32], index: 4, kind: input, shape index: {}]
  %s5 = inlined_call_operand.hbm [shape: f32[2,16,32], index: 5, kind: output, shape index: {}]
  %s6 = sld [smem:[#allocation0]]
  $region30: #{tpu_custom_call.1} parent=0
    _
  %s8 = ssub.s32 1, %s6
  %s9 = scalar_select 0, %s8, %s6
  $region1: #{tpu_custom_call.1} parent=0
    #allocation2 [shape = 'u8[16384]{0}', space=vmem, size = 0x4000, scoped, tag = 'output window, operand 0, single buffered']
    #allocation3 [shape = 's32[1]{0}', space=sflag, size = 0x4, scoped, tag = 'scoped memory for tpu_custom_call.1']
    %10 = vsyncpa [#allocation3], 0
    // Predicated region
    $region2: #{tpu_custom_call.1} parent=1 // pred_check
      _
    $region3: #{tpu_custom_call.1} parent=1 // pred_check_branch
      %12 = sbr.rel (0) target = $region5
    $region4: #{tpu_custom_call.1} parent=1 // pred_region
      _
    $region5: #{tpu_custom_call.1} parent=1 // pred_fallthru
      _
    // Predicated region
    $region6: #{tpu_custom_call.1} parent=1 // pred_check
      _
    $region7: #{tpu_custom_call.1} parent=1 // pred_check_branch
      %14 = sbr.rel (0) target = $region9
    $region8: #{tpu_custom_call.1} parent=1 // pred_region
      _
    $region9: #{tpu_custom_call.1} parent=1 // pred_fallthru
      _
    // Predicated region
    $region10: #{tpu_custom_call.1} parent=1 // pred_check
      _
    $region11: #{tpu_custom_call.1} parent=1 // pred_check_branch
      %16 = sbr.rel (0) target = $region13
    $region12: #{tpu_custom_call.1} parent=1 // pred_region
      _
    $region13: #{tpu_custom_call.1} parent=1 // pred_fallthru
      _
    // Predicated region
    $region14: #{tpu_custom_call.1} parent=1 // pred_check
      _
    $region15: #{tpu_custom_call.1} parent=1 // pred_check_branch
      %18 = sbr.rel (0) target = $region17
    $region16: #{tpu_custom_call.1} parent=1 // pred_region
      _
    $region17: #{tpu_custom_call.1} parent=1 // pred_fallthru
      _
    // Predicated region
    $region18: #{tpu_custom_call.1} parent=1 // pred_check
      _
    $region19: #{tpu_custom_call.1} parent=1 // pred_check_branch
      %20 = sbr.rel (0) target = $region21
    $region20: #{tpu_custom_call.1} parent=1 // pred_region
      _
    $region21: #{tpu_custom_call.1} parent=1 // pred_fallthru
      _
    %v21 = vld [vmem:[%s0] sm:$0xff]
    %v22 = vld [vmem:[%s0 + $0x8] sm:$0xff]
    %v23 = vld [vmem:[%s0 + $0x10] sm:$0xff]
    %v24 = vld [vmem:[%s0 + $0x18] sm:$0xff]
    %v25 = vld [vmem:[%s1] sm:$0xff]
    %v26 = vld [vmem:[%s1 + $0x8] sm:$0xff]
    %v27 = vld [vmem:[%s1 + $0x10] sm:$0xff]
    %v28 = vld [vmem:[%s1 + $0x18] sm:$0xff]
    %v29 = vld [vmem:[%s1 + $0x20] sm:$0xff]
    %v30 = vld [vmem:[%s1 + $0x28] sm:$0xff]
    %v31 = vld [vmem:[%s1 + $0x30] sm:$0xff]
    %v32 = vld [vmem:[%s1 + $0x38] sm:$0xff]
    %v33 = vld [vmem:[%s1 + $0x40] sm:$0xff]
    %v34 = vld [vmem:[%s1 + $0x48] sm:$0xff]
    %v35 = vld [vmem:[%s1 + $0x50] sm:$0xff]
    %v36 = vld [vmem:[%s1 + $0x58] sm:$0xff]
    %v37 = vld [vmem:[%s1 + $0x60] sm:$0xff]
    %v38 = vld [vmem:[%s1 + $0x68] sm:$0xff]
    %v39 = vld [vmem:[%s1 + $0x70] sm:$0xff]
    %v40 = vld [vmem:[%s1 + $0x78] sm:$0xff]
    %41 = vmatpush.msra.mxu0 %v40
    %42 = vmatpush.msra.mxu0 %v39
    %43 = vmatpush.msra.mxu0 %v38
    %44 = vmatpush.msra.mxu0 %v37
    %45 = vmatpush.msra.mxu0 %v36
    %46 = vmatpush.msra.mxu0 %v35
    %47 = vmatpush.msra.mxu0 %v34
    %48 = vmatpush.msra.mxu0 %v33
    %49 = vmatpush.msra.mxu0 %v32
    %50 = vmatpush.msra.mxu0 %v31
    %51 = vmatpush.msra.mxu0 %v30
    %52 = vmatpush.msra.mxu0 %v29
    %53 = vmatpush.msra.mxu0 %v28
    %54 = vmatpush.msra.mxu0 %v27
    %55 = vmatpush.msra.mxu0 %v26
    %56 = vmatpush.msra.mxu0 %v25
    %57 = vmatmul.f32.gmra.mxu0 %v21
    %v58 = vpop.f32.mrf.mxu0
    %v59 = vadd.f32 0.0, %v58
    %60 = vmatmul.f32.gmra.mxu0 %v22
    %v61 = vpop.f32.mrf.mxu0
    %v62 = vadd.f32 0.0, %v61
    %63 = vmatmul.f32.gmra.mxu0 %v23
    %v64 = vpop.f32.mrf.mxu0
    %v65 = vadd.f32 0.0, %v64
    %66 = vmatmul.f32.gmra.mxu0 %v24
    %v67 = vpop.f32.mrf.mxu0
    %v68 = vadd.f32 0.0, %v67
    %69 = vdwg.mxu0
    %v70 = vmax.f32 %v59, 0.0
    %v71 = vmax.f32 %v62, 0.0
    %v72 = vmax.f32 %v65, 0.0
    %v73 = vmax.f32 %v68, 0.0
    %v74 = vld [vmem:[%s2] sm:$0xff]
    %v75 = vld [vmem:[%s2 + $0x8] sm:$0xff]
    %v76 = vld [vmem:[%s2 + $0x10] sm:$0xff]
    %v77 = vld [vmem:[%s2 + $0x18] sm:$0xff]
    %v78 = vld [vmem:[%s3] sm:$0x1]
    %v80 = vperm.slane %v78, 0
    %vm82 = vcmask 261120
    %v84 = vsel %vm82, %v70, 0
    %v87 = vsel %vm82, %v71, 0
    %v90 = vsel %vm82, %v72, 0
    %v93 = vsel %vm82, %v73, 0
    %95 = vmatpush.msra.mxu0 0.0
    %96 = vmatpush.msra.mxu0 0.0
    %97 = vmatpush.msra.mxu0 0.0
    %98 = vmatpush.msra.mxu0 0.0
    %99 = vmatpush.msra.mxu0 0.0
    %100 = vmatpush.msra.mxu0 0.0
    %101 = vmatpush.msra.mxu0 0.0
    %102 = vmatpush.msra.mxu0 0.0
    %103 = vmatpush.msra.mxu0 0.0
    %104 = vmatpush.msra.mxu0 0.0
    %105 = vmatpush.msra.mxu0 0.0
    %106 = vmatpush.msra.mxu0 0.0
    %107 = vmatpush.msra.mxu0 %v77
    %108 = vmatpush.msra.mxu0 %v76
    %109 = vmatpush.msra.mxu0 %v75
    %110 = vmatpush.msra.mxu0 %v74
    %111 = vmatmul.f32.gmra.mxu0 %v84
    %v112 = vpop.f32.mrf.mxu0
    %v113 = vadd.f32 %v80, %v112
    %114 = vmatmul.f32.gmra.mxu0 %v87
    %v115 = vpop.f32.mrf.mxu0
    %v116 = vadd.f32 %v80, %v115
    %117 = vmatmul.f32.gmra.mxu0 %v90
    %v118 = vpop.f32.mrf.mxu0
    %v119 = vadd.f32 %v80, %v118
    %120 = vmatmul.f32.gmra.mxu0 %v93
    %v121 = vpop.f32.mrf.mxu0
    %v122 = vadd.f32 %v80, %v121
    %123 = vdwg.mxu0
    %124 = vst.msk [vmem:[#allocation2] sm:$0xff] %vm82, %v113
    %125 = vst.msk [vmem:[#allocation2 + $0x8] sm:$0xff] %vm82, %v116
    %126 = vst.msk [vmem:[#allocation2 + $0x10] sm:$0xff] %vm82, %v119
    %127 = vst.msk [vmem:[#allocation2 + $0x18] sm:$0xff] %vm82, %v122
    %v128 = vld [vmem:[%s4] sm:$0x3]
    %v130 = vrot.slane %v128, 1
    %vm132 = vcmask 253952
    %133 = vst.msk [vmem:[#allocation2] sm:$0x1] %vm132, %v128
    %134 = vst.msk [vmem:[#allocation2 + $0x10] sm:$0x1] %vm132, %v130
    // Predicated region
    $region22: #{tpu_custom_call.1} parent=1 // pred_check
      _
    $region23: #{tpu_custom_call.1} parent=1 // pred_check_branch
      %136 = sbr.rel (0) target = $region25
    $region24: #{tpu_custom_call.1} parent=1 // pred_region
      %138 = vsyncadd [#allocation3], 0
      %s139 = sshll.u32 [#allocation2], 4
      %s140 = int_to_ptr.vmem [resolvable:$true] %s139
      %s141 = sshll.u32 %s5, 4
      %s142 = int_to_ptr.hbm [resolvable:$true] %s141
      %147 = dma.vmem_to_hbm [thread:$0]  %s140, 512, %s142, [#allocation3], 128, 128, 8
    $region25: #{tpu_custom_call.1} parent=1 // pred_fallthru
      _
    // Predicated region
    $region26: #{tpu_custom_call.1} parent=1 // pred_check
      _
    $region27: #{tpu_custom_call.1} parent=1 // pred_check_branch
      %149 = sbr.rel (0) target = $region29
    $region28: #{tpu_custom_call.1} parent=1 // pred_region
      %151 = dma.done [#allocation3], 512
    $region29: #{tpu_custom_call.1} parent=1 // pred_fallthru
      _
    %152 = vsyncpa [#allocation3], 1

</llo_original>
